<compile_context>
chip_gen: v6e
topology: v6e:2x2x1
jax: 0.10.0
libtpu: 0.0.40
codegen_flags: <defaults>
</compile_context>

<pallas_src>
import numpy as np
import jax
import jax.numpy as jnp
from jax import lax
from jax.experimental import pallas as pl
from jax.experimental.pallas import tpu as pltpu


# --------------------------- small helpers ----------------------------------

def _round_up(x, m):
    return (x + m - 1) // m * m


def _pick_tile(total, cap, unit):
    """Largest multiple of `unit` <= cap that divides `total` (total if <= cap)."""
    if total <= cap:
        return total
    best = unit
    d = unit
    while d <= cap:
        if total % d == 0:
            best = d
        d += unit
    return best


_VMEM_LIMIT = 32 * 1024 * 1024      # explicit scoped-VMEM budget (safe on v5e/v6e/v7x)


# --------------------- generic fused tiled matmul kernel ---------------------
#
#   O = post( W @ pre(X) )        W: (Nout, K) bf16,  X: (>=K, Mp) bf16
#   pre(X)  = relu(X * pre_s + pre_t)     (fused BatchNorm+ReLU prologue, per K)
#   post(Z) = relu(Z * post_s + post_t)   (fused BatchNorm+ReLU epilogue, per N)
#             or sigmoid(Z + bias)        (classifier head)

def _make_mm_kernel(has_pre, has_post, has_bias, sigmoid, has_alias):
    def kernel(*refs):
        it = iter(refs)
        w_ref = next(it)
        x_ref = next(it)
        pre_s = next(it) if has_pre else None
        pre_t = next(it) if has_pre else None
        post_s = next(it) if has_post else None
        post_t = next(it) if has_post else None
        b_ref = next(it) if has_bias else None
        if has_alias:
            next(it)                      # aliased pass-through buffer (unused)
        o_ref = next(it)
        acc_ref = next(it)

        k = pl.program_id(2)

        @pl.when(k == 0)
        def _init():
            acc_ref[...] = jnp.zeros_like(acc_ref)

        x = x_ref[...]
        if has_pre:
            xf = x.astype(jnp.float32) * pre_s[...] + pre_t[...]
            x = jnp.maximum(xf, 0.0).astype(jnp.bfloat16)
        acc_ref[...] += jnp.dot(w_ref[...], x, preferred_element_type=jnp.float32)

        @pl.when(k == pl.num_programs(2) - 1)
        def _finalize():
            z = acc_ref[...]
            if has_post:
                z = jnp.maximum(z * post_s[...] + post_t[...], 0.0)
            if has_bias:
                z = z + b_ref[...]
            if sigmoid:
                z = jax.nn.sigmoid(z)
            o_ref[...] = z.astype(o_ref.dtype)

    return kernel


def fused_matmul(w, x, *, pre_scale=None, pre_shift=None,
                 post_scale=None, post_shift=None,
                 bias=None, sigmoid=False, out_dtype=jnp.bfloat16,
                 alias_out=None, alias_row_offset=0):
    """Tiled, K-accumulating channels-major matmul with fused BN/ReLU epilogues.

    w: (Nout, K) bf16 (K a multiple of 128, Nout a multiple of 16, padded at init)
    x: (Kx, Mp)  bf16 with Kx >= K (only the first K rows are read), Mp % 128 == 0
    alias_out: optional (C, Mp) buffer; the (Nout, Mp) result is written in place
               at row `alias_row_offset` (input_output_aliases) -- used to build
               the DenseNet concat buffer without per-layer copies.
    """
    Nout, K = w.shape
    Mp = x.shape[1]
    assert K % 128 == 0 and Mp % 128 == 0 and Nout % 16 == 0
    assert x.shape[0] >= K

    tn = Nout if Nout <= 256 else _pick_tile(Nout, 256, 16)
    tk = _pick_tile(K, 512, 128)
    tm = _pick_tile(Mp, 512, 128)
    gn, gm, gk = Nout // tn, Mp // tm, K // tk

    has_pre = pre_scale is not None
    has_post = post_scale is not None
    has_bias = bias is not None
    has_alias = alias_out is not None

    operands = [w, x]
    in_specs = [pl.BlockSpec((tn, tk), lambda i, j, k: (i, k)),
                pl.BlockSpec((tk, tm), lambda i, j, k: (k, j))]
    if has_pre:
        operands += [pre_scale, pre_shift]
        in_specs += [pl.BlockSpec((tk, 1), lambda i, j, k: (k, 0))] * 2
    if has_post:
        operands += [post_scale, post_shift]
        in_specs += [pl.BlockSpec((tn, 1), lambda i, j, k: (i, 0))] * 2
    if has_bias:
        operands += [bias]
        in_specs += [pl.BlockSpec((tn, 1), lambda i, j, k: (i, 0))]

    if has_alias:
        assert alias_row_offset % tn == 0 and alias_out.shape[1] == Mp
        operands += [alias_out]
        in_specs += [pl.BlockSpec(memory_space=pl.ANY)]   # raw pass-through, no DMA
        alias_idx = len(operands) - 1
        row_blk = alias_row_offset // tn
        out_shape = jax.ShapeDtypeStruct(alias_out.shape, alias_out.dtype)
        out_spec = pl.BlockSpec((tn, tm), lambda i, j, k: (row_blk + i, j))
        io_aliases = {alias_idx: 0}
    else:
        out_shape = jax.ShapeDtypeStruct((Nout, Mp), out_dtype)
        out_spec = pl.BlockSpec((tn, tm), lambda i, j, k: (i, j))
        io_aliases = {}

    kernel = _make_mm_kernel(has_pre, has_post, has_bias, sigmoid, has_alias)

    return pl.pallas_call(
        kernel,
        grid=(gn, gm, gk),
        in_specs=in_specs,
        out_specs=out_spec,
        out_shape=out_shape,
        scratch_shapes=[pltpu.VMEM((tn, tm), jnp.float32)],
        input_output_aliases=io_aliases,
        compiler_params=pltpu.CompilerParams(
            dimension_semantics=("parallel", "parallel", "arbitrary"),
            vmem_limit_bytes=_VMEM_LIMIT),
    )(*operands)


# ------------------- fused norm5 + ReLU + global avg pool --------------------

def _gap_kernel(x_ref, s_ref, t_ref, p_ref, o_ref):
    z = jnp.maximum(x_ref[...].astype(jnp.float32) * s_ref[...] + t_ref[...], 0.0)
    o_ref[...] = jnp.dot(z, p_ref[...],
                         preferred_element_type=jnp.float32).astype(o_ref.dtype)


def bnrelu_gap(feat, scale, shift, pool):
    """(C, Mp) channels-major features -> (C, Nbp) per-sample pooled features."""
    C, Mp = feat.shape
    Nbp = pool.shape[1]
    # final reduction is tiny; a single full-block call is fine here
    return pl.pallas_call(
        _gap_kernel,
        grid=(1,),
        in_specs=[pl.BlockSpec((C, Mp), lambda i: (0, 0)),
                  pl.BlockSpec((C, 1), lambda i: (0, 0)),
                  pl.BlockSpec((C, 1), lambda i: (0, 0)),
                  pl.BlockSpec((Mp, Nbp), lambda i: (0, 0))],
        out_specs=pl.BlockSpec((C, Nbp), lambda i: (0, 0)),
        out_shape=jax.ShapeDtypeStruct((C, Nbp), jnp.bfloat16),
        compiler_params=pltpu.CompilerParams(
            dimension_semantics=("arbitrary",),
            vmem_limit_bytes=_VMEM_LIMIT),
    )(feat, scale, shift, pool)


# --------------------------- conv / pool glue --------------------------------

def _im2colT(x_cnhw, kh, kw, stride, pad):
    """Channels-major im2col: (C, N, H, W) -> ((kh*kw*C), N*Ho*Wo).
    # TODO(synk): replace the materialized im2col of the 3x3 growth conv with an
    # in-kernel 9-tap K-loop over shifted row views (manual DMA)."""
    C, N, H, W = x_cnhw.shape
    xp = jnp.pad(x_cnhw, ((0, 0), (0, 0), (pad, pad), (pad, pad)))
    Ho = (H + 2 * pad - kh) // stride + 1
    Wo = (W + 2 * pad - kw) // stride + 1
    taps = []
    for di in range(kh):
        for dj in range(kw):
            taps.append(xp[:, :, di:di + (Ho - 1) * stride + 1:stride,
                              dj:dj + (Wo - 1) * stride + 1:stride])
    pat = jnp.stack(taps, axis=0)                      # (kh*kw, C, N, Ho, Wo)
    return pat.reshape(kh * kw * C, N * Ho * Wo), Ho, Wo


def maxpool_3x3_s2_p1(x_cnhw):
    # TODO(synk): pooling windows stay as lax.reduce_window glue, not Pallas.
    return lax.reduce_window(x_cnhw, jnp.array(-jnp.inf, x_cnhw.dtype), lax.max,
                             (1, 1, 3, 3), (1, 1, 2, 2),
                             [(0, 0), (0, 0), (1, 1), (1, 1)])


def avgpool_2x2(x_cnhw):
    s = lax.reduce_window(x_cnhw, jnp.array(0.0, x_cnhw.dtype), lax.add,
                          (1, 1, 2, 2), (1, 1, 2, 2), [(0, 0)] * 4)
    return s * jnp.array(0.25, x_cnhw.dtype)


# --------------------------- DenseNet121 definition --------------------------

GROWTH = 32
BN_SIZE = 4
BLOCK_CONFIG = (6, 12, 24, 16)
NUM_INIT_FEATURES = 64


def _conv_w(key, cout, cin, kh, kw):
    fan_in = cin * kh * kw
    return (jax.random.normal(key, (cout, cin, kh, kw), jnp.float32)
            * np.sqrt(2.0 / fan_in)).astype(jnp.float32)


def _bn_p(key, c):
    k1, k2, k3 = jax.random.split(key, 3)
    gamma = (1.0 + 0.1 * jax.random.normal(k1, (c,))).astype(jnp.float32)
    beta = (0.1 * jax.random.normal(k2, (c,))).astype(jnp.float32)
    mean = (0.1 * jax.random.normal(k3, (c,))).astype(jnp.float32)
    var = jnp.ones((c,), jnp.float32)
    return (gamma, beta, mean, var)


def init_densenet121_params(key, out_size):
    keys = iter(jax.random.split(key, 1024))
    nk = lambda: next(keys)
    params = {
        'conv0': _conv_w(nk(), NUM_INIT_FEATURES, 3, 7, 7),
        'norm0': _bn_p(nk(), NUM_INIT_FEATURES),
        'blocks': [],
        'trans': [],
    }
    nf = NUM_INIT_FEATURES
    for bi, nlayers in enumerate(BLOCK_CONFIG):
        layers = []
        for li in range(nlayers):
            cin = nf + li * GROWTH
            layers.append({
                'norm1': _bn_p(nk(), cin),
                'conv1': _conv_w(nk(), BN_SIZE * GROWTH, cin, 1, 1),
                'norm2': _bn_p(nk(), BN_SIZE * GROWTH),
                'conv2': _conv_w(nk(), GROWTH, BN_SIZE * GROWTH, 3, 3),
            })
        params['blocks'].append(layers)
        nf = nf + nlayers * GROWTH
        if bi != len(BLOCK_CONFIG) - 1:
            params['trans'].append({
                'norm': _bn_p(nk(), nf),
                'conv': _conv_w(nk(), nf // 2, nf, 1, 1),
            })
            nf = nf // 2
    params['norm5'] = _bn_p(nk(), nf)
    params['cls_w'] = (jax.random.normal(nk(), (out_size, nf), jnp.float32)
                       * np.sqrt(1.0 / nf)).astype(jnp.float32)
    params['cls_b'] = jnp.zeros((out_size,), jnp.float32)
    return params


# ------------------- one-time weight / BN preparation ------------------------

def _bn_fold(bn, eps=1e-5):
    gamma, beta, mean, var = bn
    scale = gamma * lax.rsqrt(var + eps)
    shift = beta - mean * scale
    return scale.astype(jnp.float32), shift.astype(jnp.float32)


def _prep_conv(w_oihw, k_pad=None):
    cout, cin, kh, kw = w_oihw.shape
    wmat = jnp.transpose(w_oihw, (0, 2, 3, 1)).reshape(cout, kh * kw * cin)
    K = kh * kw * cin
    Kp = _round_up(K, 128) if k_pad is None else k_pad
    if Kp != K:
        wmat = jnp.pad(wmat, ((0, 0), (0, Kp - K)))
    return wmat.astype(jnp.bfloat16)


def _prep_vec(v, length=None):
    v = v.astype(jnp.float32).reshape(-1, 1)
    if length is not None and length != v.shape[0]:
        v = jnp.pad(v, ((0, length - v.shape[0]), (0, 0)))
    return v


def prepare_params(params, out_size):
    """Fold BN, transpose/pad/cast weights to kernel-ready form (done once)."""
    prep = {'out_size': out_size, 'blocks': [], 'trans': []}
    s0, t0 = _bn_fold(params['norm0'])
    prep['conv0_w'] = _prep_conv(params['conv0'])                # (64, 256)
    prep['conv0_post'] = (_prep_vec(s0), _prep_vec(t0))

    nf = NUM_INIT_FEATURES
    for bi, layers in enumerate(params['blocks']):
        blk = []
        for li, p in enumerate(layers):
            cin = nf + li * GROWTH
            kp = _round_up(cin, 128)
            s1, t1 = _bn_fold(p['norm1'])
            s2, t2 = _bn_fold(p['norm2'])
            blk.append({
                'w1': _prep_conv(p['conv1'], k_pad=kp),          # (128, kp)
                'pre1': (_prep_vec(s1, kp), _prep_vec(t1, kp)),
                'post1': (_prep_vec(s2), _prep_vec(t2)),         # (128, 1)
                'w2': _prep_conv(p['conv2']),                    # (32, 1152)
                'row_off': cin,
            })
        prep['blocks'].append(blk)
        nf += len(layers) * GROWTH
        if bi != len(params['blocks']) - 1:
            tp = params['trans'][bi]
            st, tt = _bn_fold(tp['norm'])
            prep['trans'].append({'w': _prep_conv(tp['conv']),
                                  'pre': (_prep_vec(st), _prep_vec(tt))})
            nf //= 2

    s5, t5 = _bn_fold(params['norm5'])
    prep['norm5'] = (_prep_vec(s5), _prep_vec(t5))
    nout_pad = _round_up(out_size, 16)
    prep['cls_w'] = jnp.pad(params['cls_w'],
                            ((0, nout_pad - out_size), (0, 0))).astype(jnp.bfloat16)
    prep['cls_b'] = jnp.pad(params['cls_b'].reshape(-1, 1),
                            ((0, nout_pad - out_size), (0, 0))).astype(jnp.float32)
    return prep


# ------------------------------ forward pass ---------------------------------

def densenet121_forward(prep, x_nchw):
    """x_nchw: (N, 3, H, W) float32 (PyTorch layout at the boundary)."""
    N = x_nchw.shape[0]
    x = jnp.transpose(x_nchw, (1, 0, 2, 3)).astype(jnp.bfloat16)   # -> CNHW

    # stem: conv0 (7x7 s2 p3) with fused norm0+ReLU epilogue, then 3x3/2 maxpool
    pat, H, W = _im2colT(x, 7, 7, 2, 3)
    K, M = pat.shape
    Kp = prep['conv0_w'].shape[1]
    Mp = _round_up(M, 128)
    pat = jnp.pad(pat, ((0, Kp - K), (0, Mp - M)))
    s0, t0 = prep['conv0_post']
    y = fused_matmul(prep['conv0_w'], pat, post_scale=s0, post_shift=t0)
    y = y[:, :M].reshape(NUM_INIT_FEATURES, N, H, W)
    y = maxpool_3x3_s2_p1(y)
    H, W = y.shape[2], y.shape[3]

    nf = NUM_INIT_FEATURES
    for bi, layers in enumerate(prep['blocks']):
        c_total = nf + len(layers) * GROWTH
        M = N * H * W
        Mp = _round_up(M, 128)
        # preallocated full-width concat buffer for this dense block
        feat = jnp.pad(y.reshape(nf, M), ((0, c_total - nf), (0, Mp - M)))

        for lyr in layers:
            ps, pt = lyr['pre1']
            qs, qt = lyr['post1']
            # norm1+relu1 -> 1x1 conv1 -> norm2+relu2, all fused in one call;
            # the 1x1 conv reads the (padded) concat buffer directly.
            bott = fused_matmul(lyr['w1'], feat, pre_scale=ps, pre_shift=pt,
                                post_scale=qs, post_shift=qt)      # (128, Mp)
            # 3x3 growth conv; its 32 new channels are written in place into
            # `feat` at this layer's channel offset (no concatenate).
            b = bott[:, :M].reshape(BN_SIZE * GROWTH, N, H, W)
            pat2, _, _ = _im2colT(b, 3, 3, 1, 1)                   # (1152, M)
            pat2 = jnp.pad(pat2, ((0, 0), (0, Mp - M)))
            feat = fused_matmul(lyr['w2'], pat2,
                                alias_out=feat,
                                alias_row_offset=lyr['row_off'])
        nf = c_total

        if bi != len(prep['blocks']) - 1:
            tr = prep['trans'][bi]
            ts, tt = tr['pre']
            y = fused_matmul(tr['w'], feat, pre_scale=ts, pre_shift=tt)
            nf //= 2
            y = y[:nf, :M].reshape(nf, N, H, W)
            y = avgpool_2x2(y)                                     # transition pool
            H, W = y.shape[2], y.shape[3]

    # norm5 + ReLU + global average pool fused in one Pallas reduction kernel
    s5, t5 = prep['norm5']
    hw = H * W
    Mp = feat.shape[1]
    Nbp = _round_up(N, 128)
    pool = np.zeros((Mp, Nbp), np.float32)
    for n in range(N):
        pool[n * hw:(n + 1) * hw, n] = 1.0 / hw
    feats = bnrelu_gap(feat, s5, t5, jnp.asarray(pool))            # (1024, Nbp)

    # classifier: Linear + Sigmoid (fused bias + sigmoid epilogue)
    logits = fused_matmul(prep['cls_w'], feats, bias=prep['cls_b'],
                          sigmoid=True, out_dtype=jnp.float32)     # (16, Nbp)
    out_size = prep['out_size']
    return jnp.transpose(logits[:out_size, :N])                    # (N, out_size)


# --------------------------------- main ---------------------------------------

if __name__ == "__main__":
    OUT_SIZE = 14                       # e.g. CheXNet-style multi-label head
    key = jax.random.PRNGKey(0)
    kp, kx = jax.random.split(key)
    params = init_densenet121_params(kp, OUT_SIZE)
    prep = prepare_params(params, OUT_SIZE)
    x = jax.random.normal(kx, (2, 3, 32, 32), jnp.float32)   # small NCHW input

    out = densenet121_forward(prep, x)
    out = jax.block_until_ready(out)

    assert out.shape == (2, OUT_SIZE), out.shape
    assert bool(jnp.all(jnp.isfinite(out)))
    assert bool(jnp.all((out >= 0.0) & (out <= 1.0)))   # sigmoid range
    print("KERNEL_OK")
</pallas_src>

<mosaic_0001>
module attributes {stable_mosaic.version = 11 : i64} {
  func.func @kernel(%arg0: i32, %arg1: i32, %arg2: i32, %arg3: memref<64x256xbf16, #tpu.memory_space<vmem>>, %arg4: memref<256x512xbf16, #tpu.memory_space<vmem>>, %arg5: memref<64x1xf32, #tpu.memory_space<vmem>>, %arg6: memref<64x1xf32, #tpu.memory_space<vmem>>, %arg7: memref<64x512xbf16, #tpu.memory_space<vmem>>, %arg8: memref<64x512xf32, #tpu.memory_space<vmem>>) attributes {dimension_semantics = [#tpu.dimension_semantics<parallel>, #tpu.dimension_semantics<parallel>, #tpu.dimension_semantics<arbitrary>], iteration_bounds = array<i64: 1, 1, 1>, scalar_prefetch = 0 : i64, scratch_operands = 1 : i64, tpu.core_type = #tpu.core_type<tc>, window_params = [{transform_indices = @transform_0, window_bounds = array<i64: 64, 256>}, {transform_indices = @transform_1, window_bounds = array<i64: 256, 512>}, {transform_indices = @transform_2, window_bounds = array<i64: 64, 1>}, {transform_indices = @transform_3, window_bounds = array<i64: 64, 1>}, {transform_indices = @transform_4, window_bounds = array<i64: 64, 512>}]} {
    %c0_i32 = arith.constant 0 : i32
    %0 = arith.cmpi eq, %arg2, %c0_i32 : i32
    %1 = arith.extui %0 : i1 to i32
    %c0_i32_0 = arith.constant 0 : i32
    %2 = arith.cmpi ne, %1, %c0_i32_0 : i32
    scf.if %2 {
      %cst_10 = arith.constant 0.000000e+00 : f32
      %12 = vector.broadcast %cst_10 : f32 to vector<64x512xf32>
      %c0_11 = arith.constant 0 : index
      %c0_12 = arith.constant 0 : index
      %13 = vector.load %arg8[%c0_11, %c0_12] : memref<64x512xf32, #tpu.memory_space<vmem>>, vector<64x512xf32>
      tpu.vector_store %arg8[%c0_11, %c0_12], %12 {strides = array<i32>} : memref<64x512xf32, #tpu.memory_space<vmem>>, vector<64x512xf32>,
    } else {
    }
    %c0 = arith.constant 0 : index
    %c0_1 = arith.constant 0 : index
    %3 = vector.load %arg4[%c0, %c0_1] : memref<256x512xbf16, #tpu.memory_space<vmem>>, vector<256x512xbf16>
    %c0_2 = arith.constant 0 : index
    %c0_3 = arith.constant 0 : index
    %4 = vector.load %arg8[%c0_2, %c0_3] : memref<64x512xf32, #tpu.memory_space<vmem>>, vector<64x512xf32>
    %c0_4 = arith.constant 0 : index
    %c0_5 = arith.constant 0 : index
    %5 = vector.load %arg3[%c0_4, %c0_5] : memref<64x256xbf16, #tpu.memory_space<vmem>>, vector<64x256xbf16>
    %cst = arith.constant dense<0.000000e+00> : vector<64x512xf32>
    %6 = tpu.matmul %5, %3, %cst {dimension_numbers = #tpu.dot_dimension_numbers<[1], [0], [0], [1], [0, 0, 1, 1], [], []>} : vector<64x256xbf16>, vector<256x512xbf16>, vector<64x512xf32> -> vector<64x512xf32>
    %7 = arith.addf %4, %6 : vector<64x512xf32>
    %c0_6 = arith.constant 0 : index
    %c0_7 = arith.constant 0 : index
    %8 = vector.load %arg8[%c0_6, %c0_7] : memref<64x512xf32, #tpu.memory_space<vmem>>, vector<64x512xf32>
    tpu.vector_store %arg8[%c0_6, %c0_7], %7 {strides = array<i32>} : memref<64x512xf32, #tpu.memory_space<vmem>>, vector<64x512xf32>,
    %c0_i32_8 = arith.constant 0 : i32
    %9 = arith.cmpi eq, %arg2, %c0_i32_8 : i32
    %10 = arith.extui %9 : i1 to i32
    %c0_i32_9 = arith.constant 0 : i32
    %11 = arith.cmpi ne, %10, %c0_i32_9 : i32
    scf.if %11 {
      %c0_10 = arith.constant 0 : index
      %c0_11 = arith.constant 0 : index
      %12 = vector.load %arg8[%c0_10, %c0_11] : memref<64x512xf32, #tpu.memory_space<vmem>>, vector<64x512xf32>
      %c0_12 = arith.constant 0 : index
      %c0_13 = arith.constant 0 : index
      %13 = vector.load %arg5[%c0_12, %c0_13] : memref<64x1xf32, #tpu.memory_space<vmem>>, vector<64x1xf32>
      %14 = vector.broadcast %13 : vector<64x1xf32> to vector<64x512xf32>
      %15 = arith.mulf %12, %14 : vector<64x512xf32>
      %c0_14 = arith.constant 0 : index
      %c0_15 = arith.constant 0 : index
      %16 = vector.load %arg6[%c0_14, %c0_15] : memref<64x1xf32, #tpu.memory_space<vmem>>, vector<64x1xf32>
      %17 = vector.broadcast %16 : vector<64x1xf32> to vector<64x512xf32>
      %18 = arith.addf %15, %17 : vector<64x512xf32>
      %cst_16 = arith.constant 0.000000e+00 : f32
      %19 = vector.broadcast %cst_16 : f32 to vector<64x512xf32>
      %20 = arith.maximumf %18, %19 : vector<64x512xf32>
      %21 = arith.truncf %20 : vector<64x512xf32> to vector<64x512xbf16>
      %c0_17 = arith.constant 0 : index
      %c0_18 = arith.constant 0 : index
      %22 = vector.load %arg7[%c0_17, %c0_18] : memref<64x512xbf16, #tpu.memory_space<vmem>>, vector<64x512xbf16>
      tpu.vector_store %arg7[%c0_17, %c0_18], %21 {strides = array<i32>} : memref<64x512xbf16, #tpu.memory_space<vmem>>, vector<64x512xbf16>,
    } else {
    }
    return
  }
  func.func @transform_0(%arg0: i32, %arg1: i32, %arg2: i32) -> (i32, i32) {
    %c0_i32 = arith.constant 0 : i32
    return %arg0, %arg2 : i32, i32
  }
  func.func @transform_1(%arg0: i32, %arg1: i32, %arg2: i32) -> (i32, i32) {
    %c0_i32 = arith.constant 0 : i32
    return %arg2, %arg1 : i32, i32
  }
  func.func @transform_2(%arg0: i32, %arg1: i32, %arg2: i32) -> (i32, i32) {
    %c0_i32 = arith.constant 0 : i32
    %c0_i32_0 = arith.constant 0 : i32
    return %arg0, %c0_i32 : i32, i32
  }
  func.func @transform_3(%arg0: i32, %arg1: i32, %arg2: i32) -> (i32, i32) {
    %c0_i32 = arith.constant 0 : i32
    %c0_i32_0 = arith.constant 0 : i32
    return %arg0, %c0_i32 : i32, i32
  }
  func.func @transform_4(%arg0: i32, %arg1: i32, %arg2: i32) -> (i32, i32) {
    %c0_i32 = arith.constant 0 : i32
    return %arg0, %arg1 : i32, i32
  }
}

</mosaic_0001>

<llo_original>
// kernel: tpu_custom_call.1
$region0: #{tpu_custom_call.1}
  #allocation0 [shape = 'u32[]', space=smem, size = 0x4, offset = 0x4, fixed_abs, tag = 'smem constant byte address 0x4 - core index']
  #allocation1 [shape = 'u32[144,128]{1,0:T(1,128)}', space=vmem, size = 0x12000, scoped, tag = 'internal scratch']
  #allocation2 [shape = 'f32[64,512]{1,0:T(8,128)}', space=vmem, size = 0x20000, scoped, tag = 'scratch operand']
  %s0 = inlined_call_operand.vmem [shape: bf16[64,256], index: 0, kind: input, shape index: {}]
  %s1 = inlined_call_operand.hbm [shape: bf16[256,512], index: 1, kind: input, shape index: {}]
  %s2 = inlined_call_operand.vmem [shape: f32[64,1], index: 2, kind: input, shape index: {}]
  %s3 = inlined_call_operand.vmem [shape: f32[64,1], index: 3, kind: input, shape index: {}]
  %s4 = inlined_call_operand.hbm [shape: bf16[64,512], index: 4, kind: output, shape index: {}]
  %s5 = sld [smem:[#allocation0]]
  $region38: #{tpu_custom_call.1} parent=0
    _
  %s7 = ssub.s32 1, %s5
  %s8 = scalar_select 0, %s7, %s5
  $region1: #{tpu_custom_call.1} parent=0
    #allocation3 [shape = 'u8[262144]{0}', space=vmem, size = 0x40000, scoped, tag = 'input window, operand 1, single buffered']
    #allocation4 [shape = 's32[1]{0}', space=sflag, size = 0x4, scoped, tag = 'scoped memory for tpu_custom_call.1']
    #allocation5 [shape = 's32[1]{0}', space=sflag, size = 0x4, scoped, tag = 'scoped memory for tpu_custom_call.1']
    #allocation6 [shape = 'u8[65536]{0}', space=vmem, size = 0x10000, scoped, tag = 'output window, operand 0, single buffered']
    %9 = vsyncpa [#allocation4], 0
    %10 = vsyncpa [#allocation5], 0
    // Predicated region
    $region2: #{tpu_custom_call.1} parent=1 // pred_check
      _
    $region3: #{tpu_custom_call.1} parent=1 // pred_check_branch
      %12 = sbr.rel (0) target = $region5
    $region4: #{tpu_custom_call.1} parent=1 // pred_region
      _
    $region5: #{tpu_custom_call.1} parent=1 // pred_fallthru
      _
    // Predicated region
    $region6: #{tpu_custom_call.1} parent=1 // pred_check
      _
    $region7: #{tpu_custom_call.1} parent=1 // pred_check_branch
      %14 = sbr.rel (0) target = $region9
    $region8: #{tpu_custom_call.1} parent=1 // pred_region
      %s16 = ssub.s32 8192, 8192
      %17 = vsyncadd [#allocation4], %s16
      %s18 = sshll.u32 [#allocation3], 4
      %s19 = int_to_ptr.vmem [resolvable:$true] %s18
      %24 = dma.hbm_to_vmem [thread:$0]  %s1, 8192, %s19, [#allocation4], 256, 256, 16
    $region9: #{tpu_custom_call.1} parent=1 // pred_fallthru
      _
    // Predicated region
    $region10: #{tpu_custom_call.1} parent=1 // pred_check
      _
    $region11: #{tpu_custom_call.1} parent=1 // pred_check_branch
      %26 = sbr.rel (0) target = $region13
    $region12: #{tpu_custom_call.1} parent=1 // pred_region
      _
    $region13: #{tpu_custom_call.1} parent=1 // pred_fallthru
      _
    // Predicated region
    $region14: #{tpu_custom_call.1} parent=1 // pred_check
      _
    $region15: #{tpu_custom_call.1} parent=1 // pred_check_branch
      %28 = sbr.rel (0) target = $region17
    $region16: #{tpu_custom_call.1} parent=1 // pred_region
      _
    $region17: #{tpu_custom_call.1} parent=1 // pred_fallthru
      _
    // Predicated region
    $region18: #{tpu_custom_call.1} parent=1 // pred_check
      _
    $region19: #{tpu_custom_call.1} parent=1 // pred_check_branch
      %30 = sbr.rel (0) target = $region21
    $region20: #{tpu_custom_call.1} parent=1 // pred_region
      %31 = dma.done [#allocation4], 8192
    $region21: #{tpu_custom_call.1} parent=1 // pred_fallthru
      _
    %p32 = scmp.eq.s32.totalorder 0, 0
    // Predicated region
    $region22: #{tpu_custom_call.1} parent=1 // pred_check
      %p33 = pneg %p32
    $region23: #{tpu_custom_call.1} parent=1 // pred_check_branch
      %35 = sbr.rel (%p33) target = $region25
    $region24: #{tpu_custom_call.1} parent=1 // pred_region
      %36 = vst [vmem:[#allocation2] sm:$0xff] 0.0
      %37 = vst [vmem:[#allocation2 + $0x8] sm:$0xff] 0.0
      %38 = vst [vmem:[#allocation2 + $0x10] sm:$0xff] 0.0
      %39 = vst [vmem:[#allocation2 + $0x18] sm:$0xff] 0.0
      %40 = vst [vmem:[#allocation2 + $0x20] sm:$0xff] 0.0
      %41 = vst [vmem:[#allocation2 + $0x28] sm:$0xff] 0.0
      %42 = vst [vmem:[#allocation2 + $0x30] sm:$0xff] 0.0
      %43 = vst [vmem:[#allocation2 + $0x38] sm:$0xff] 0.0
      %44 = vst [vmem:[#allocation2 + $0x40] sm:$0xff] 0.0
      %45 = vst [vmem:[#allocation2 + $0x48] sm:$0xff] 0.0
      %46 = vst [vmem:[#allocation2 + $0x50] sm:$0xff] 0.0
      %47 = vst [vmem:[#allocation2 + $0x58] sm:$0xff] 0.0
      %48 = vst [vmem:[#allocation2 + $0x60] sm:$0xff] 0.0
      %49 = vst [vmem:[#allocation2 + $0x68] sm:$0xff] 0.0
      %50 = vst [vmem:[#allocation2 + $0x70] sm:$0xff] 0.0
      %51 = vst [vmem:[#allocation2 + $0x78] sm:$0xff] 0.0
      %52 = vst [vmem:[#allocation2 + $0x80] sm:$0xff] 0.0
      %53 = vst [vmem:[#allocation2 + $0x88] sm:$0xff] 0.0
      %54 = vst [vmem:[#allocation2 + $0x90] sm:$0xff] 0.0
      %55 = vst [vmem:[#allocation2 + $0x98] sm:$0xff] 0.0
      %56 = vst [vmem:[#allocation2 + $0xa0] sm:$0xff] 0.0
      %57 = vst [vmem:[#allocation2 + $0xa8] sm:$0xff] 0.0
      %58 = vst [vmem:[#allocation2 + $0xb0] sm:$0xff] 0.0
      %59 = vst [vmem:[#allocation2 + $0xb8] sm:$0xff] 0.0
      %60 = vst [vmem:[#allocation2 + $0xc0] sm:$0xff] 0.0
      %61 = vst [vmem:[#allocation2 + $0xc8] sm:$0xff] 0.0
      %62 = vst [vmem:[#allocation2 + $0xd0] sm:$0xff] 0.0
      %63 = vst [vmem:[#allocation2 + $0xd8] sm:$0xff] 0.0
      %64 = vst [vmem:[#allocation2 + $0xe0] sm:$0xff] 0.0
      %65 = vst [vmem:[#allocation2 + $0xe8] sm:$0xff] 0.0
      %66 = vst [vmem:[#allocation2 + $0xf0] sm:$0xff] 0.0
      %67 = vst [vmem:[#allocation2 + $0xf8] sm:$0xff] 0.0
    $region25: #{tpu_custom_call.1} parent=1 // pred_fallthru
      _
    %v68 = vld [vmem:[#allocation3] sm:$0xff]
    %v69 = vld [vmem:[#allocation3 + $0x8] sm:$0xff]
    %v70 = vld [vmem:[#allocation3 + $0x10] sm:$0xff]
    %v71 = vld [vmem:[#allocation3 + $0x18] sm:$0xff]
    %v72 = vld [vmem:[#allocation3 + $0x20] sm:$0xff]
    %v73 = vld [vmem:[#allocation3 + $0x28] sm:$0xff]
    %v74 = vld [vmem:[#allocation3 + $0x30] sm:$0xff]
    %v75 = vld [vmem:[#allocation3 + $0x38] sm:$0xff]
    %v76 = vld [vmem:[#allocation3 + $0x40] sm:$0xff]
    %v77 = vld [vmem:[#allocation3 + $0x48] sm:$0xff]
    %v78 = vld [vmem:[#allocation3 + $0x50] sm:$0xff]
    %v79 = vld [vmem:[#allocation3 + $0x58] sm:$0xff]
    %v80 = vld [vmem:[#allocation3 + $0x60] sm:$0xff]
    %v81 = vld [vmem:[#allocation3 + $0x68] sm:$0xff]
    %v82 = vld [vmem:[#allocation3 + $0x70] sm:$0xff]
    %v83 = vld [vmem:[#allocation3 + $0x78] sm:$0xff]
    %v84 = vld [vmem:[#allocation3 + $0x80] sm:$0xff]
    %v85 = vld [vmem:[#allocation3 + $0x88] sm:$0xff]
    %v86 = vld [vmem:[#allocation3 + $0x90] sm:$0xff]
    %v87 = vld [vmem:[#allocation3 + $0x98] sm:$0xff]
    %v88 = vld [vmem:[#allocation3 + $0xa0] sm:$0xff]
    %v89 = vld [vmem:[#allocation3 + $0xa8] sm:$0xff]
    %v90 = vld [vmem:[#allocation3 + $0xb0] sm:$0xff]
    %v91 = vld [vmem:[#allocation3 + $0xb8] sm:$0xff]
    %v92 = vld [vmem:[#allocation3 + $0xc0] sm:$0xff]
    %v93 = vld [vmem:[#allocation3 + $0xc8] sm:$0xff]
    %v94 = vld [vmem:[#allocation3 + $0xd0] sm:$0xff]
    %v95 = vld [vmem:[#allocation3 + $0xd8] sm:$0xff]
    %v96 = vld [vmem:[#allocation3 + $0xe0] sm:$0xff]
    %v97 = vld [vmem:[#allocation3 + $0xe8] sm:$0xff]
    %v98 = vld [vmem:[#allocation3 + $0xf0] sm:$0xff]
    %v99 = vld [vmem:[#allocation3 + $0xf8] sm:$0xff]
    %v100 = vld [vmem:[#allocation3 + $0x100] sm:$0xff]
    %v101 = vld [vmem:[#allocation3 + $0x108] sm:$0xff]
    %v102 = vld [vmem:[#allocation3 + $0x110] sm:$0xff]
    %v103 = vld [vmem:[#allocation3 + $0x118] sm:$0xff]
    %v104 = vld [vmem:[#allocation3 + $0x120] sm:$0xff]
    %v105 = vld [vmem:[#allocation3 + $0x128] sm:$0xff]
    %v106 = vld [vmem:[#allocation3 + $0x130] sm:$0xff]
    %v107 = vld [vmem:[#allocation3 + $0x138] sm:$0xff]
    %v108 = vld [vmem:[#allocation3 + $0x140] sm:$0xff]
    %v109 = vld [vmem:[#allocation3 + $0x148] sm:$0xff]
    %v110 = vld [vmem:[#allocation3 + $0x150] sm:$0xff]
    %v111 = vld [vmem:[#allocation3 + $0x158] sm:$0xff]
    %v112 = vld [vmem:[#allocation3 + $0x160] sm:$0xff]
    %v113 = vld [vmem:[#allocation3 + $0x168] sm:$0xff]
    %v114 = vld [vmem:[#allocation3 + $0x170] sm:$0xff]
    %v115 = vld [vmem:[#allocation3 + $0x178] sm:$0xff]
    %v116 = vld [vmem:[#allocation3 + $0x180] sm:$0xff]
    %v117 = vld [vmem:[#allocation3 + $0x188] sm:$0xff]
    %v118 = vld [vmem:[#allocation3 + $0x190] sm:$0xff]
    %v119 = vld [vmem:[#allocation3 + $0x198] sm:$0xff]
    %v120 = vld [vmem:[#allocation3 + $0x1a0] sm:$0xff]
    %v121 = vld [vmem:[#allocation3 + $0x1a8] sm:$0xff]
    %v122 = vld [vmem:[#allocation3 + $0x1b0] sm:$0xff]
    %v123 = vld [vmem:[#allocation3 + $0x1b8] sm:$0xff]
    %v124 = vld [vmem:[#allocation3 + $0x1c0] sm:$0xff]
    %v125 = vld [vmem:[#allocation3 + $0x1c8] sm:$0xff]
    %v126 = vld [vmem:[#allocation3 + $0x1d0] sm:$0xff]
    %v127 = vld [vmem:[#allocation3 + $0x1d8] sm:$0xff]
    %v128 = vld [vmem:[#allocation3 + $0x1e0] sm:$0xff]
    %v129 = vld [vmem:[#allocation3 + $0x1e8] sm:$0xff]
    %v130 = vld [vmem:[#allocation3 + $0x1f0] sm:$0xff]
    %v131 = vld [vmem:[#allocation3 + $0x1f8] sm:$0xff]
    %v132 = vld [vmem:[#allocation2] sm:$0xff]
    %v133 = vld [vmem:[#allocation2 + $0x8] sm:$0xff]
    %v134 = vld [vmem:[#allocation2 + $0x10] sm:$0xff]
    %v135 = vld [vmem:[#allocation2 + $0x18] sm:$0xff]
    %v136 = vld [vmem:[#allocation2 + $0x20] sm:$0xff]
    %v137 = vld [vmem:[#allocation2 + $0x28] sm:$0xff]
    %v138 = vld [vmem:[#allocation2 + $0x30] sm:$0xff]
    %v139 = vld [vmem:[#allocation2 + $0x38] sm:$0xff]
    %v140 = vld [vmem:[#allocation2 + $0x40] sm:$0xff]
    %v141 = vld [vmem:[#allocation2 + $0x48] sm:$0xff]
    %v142 = vld [vmem:[#allocation2 + $0x50] sm:$0xff]
    %v143 = vld [vmem:[#allocation2 + $0x58] sm:$0xff]
    %v144 = vld [vmem:[#allocation2 + $0x60] sm:$0xff]
    %v145 = vld [vmem:[#allocation2 + $0x68] sm:$0xff]
    %v146 = vld [vmem:[#allocation2 + $0x70] sm:$0xff]
    %v147 = vld [vmem:[#allocation2 + $0x78] sm:$0xff]
    %v148 = vld [vmem:[#allocation2 + $0x80] sm:$0xff]
    %v149 = vld [vmem:[#allocation2 + $0x88] sm:$0xff]
    %v150 = vld [vmem:[#allocation2 + $0x90] sm:$0xff]
    %v151 = vld [vmem:[#allocation2 + $0x98] sm:$0xff]
    %v152 = vld [vmem:[#allocation2 + $0xa0] sm:$0xff]
    %v153 = vld [vmem:[#allocation2 + $0xa8] sm:$0xff]
    %v154 = vld [vmem:[#allocation2 + $0xb0] sm:$0xff]
    %v155 = vld [vmem:[#allocation2 + $0xb8] sm:$0xff]
    %v156 = vld [vmem:[#allocation2 + $0xc0] sm:$0xff]
    %v157 = vld [vmem:[#allocation2 + $0xc8] sm:$0xff]
    %v158 = vld [vmem:[#allocation2 + $0xd0] sm:$0xff]
    %v159 = vld [vmem:[#allocation2 + $0xd8] sm:$0xff]
    %v160 = vld [vmem:[#allocation2 + $0xe0] sm:$0xff]
    %v161 = vld [vmem:[#allocation2 + $0xe8] sm:$0xff]
    %v162 = vld [vmem:[#allocation2 + $0xf0] sm:$0xff]
    %v163 = vld [vmem:[#allocation2 + $0xf8] sm:$0xff]
    %v164 = vld [vmem:[%s0] sm:$0xff]
    %v165 = vld [vmem:[%s0 + $0x8] sm:$0xff]
    %v166 = vld [vmem:[%s0 + $0x10] sm:$0xff]
    %v167 = vld [vmem:[%s0 + $0x18] sm:$0xff]
    %v168 = vld [vmem:[%s0 + $0x20] sm:$0xff]
    %v169 = vld [vmem:[%s0 + $0x28] sm:$0xff]
    %v170 = vld [vmem:[%s0 + $0x30] sm:$0xff]
    %v171 = vld [vmem:[%s0 + $0x38] sm:$0xff]
    %v180 = vunpack.c.l.b16 %v164
    %v181 = vunpack.c.h.b16 %v164
    %v182 = vunpack.c.l.b16 %v165
    %v183 = vunpack.c.h.b16 %v165
    %v184 = vunpack.c.l.b16 %v166
    %v185 = vunpack.c.h.b16 %v166
    %v186 = vunpack.c.l.b16 %v167
    %v187 = vunpack.c.h.b16 %v167
    %v188 = vunpack.c.l.b16 %v168
    %v189 = vunpack.c.h.b16 %v168
    %v190 = vunpack.c.l.b16 %v169
    %v191 = vunpack.c.h.b16 %v169
    %v192 = vunpack.c.l.b16 %v170
    %v193 = vunpack.c.h.b16 %v170
    %v194 = vunpack.c.l.b16 %v171
    %v195 = vunpack.c.h.b16 %v171
    %v196 = vpack.c.b16 %v182, %v180
    %v197 = vpack.c.b16 %v183, %v181
    %v198 = vpack.c.b16 %v186, %v184
    %v199 = vpack.c.b16 %v187, %v185
    %v200 = vpack.c.b16 %v190, %v188
    %v201 = vpack.c.b16 %v191, %v189
    %v202 = vpack.c.b16 %v194, %v192
    %v203 = vpack.c.b16 %v195, %v193
    %v276 = vunpack.c.l.b16 %v68
    %v277 = vunpack.c.h.b16 %v68
    %v278 = vunpack.c.l.b16 %v69
    %v279 = vunpack.c.h.b16 %v69
    %v280 = vunpack.c.l.b16 %v70
    %v281 = vunpack.c.h.b16 %v70
    %v282 = vunpack.c.l.b16 %v71
    %v283 = vunpack.c.h.b16 %v71
    %v284 = vunpack.c.l.b16 %v72
    %v285 = vunpack.c.h.b16 %v72
    %v286 = vunpack.c.l.b16 %v73
    %v287 = vunpack.c.h.b16 %v73
    %v288 = vunpack.c.l.b16 %v74
    %v289 = vunpack.c.h.b16 %v74
    %v290 = vunpack.c.l.b16 %v75
    %v291 = vunpack.c.h.b16 %v75
    %v292 = vunpack.c.l.b16 %v76
    %v293 = vunpack.c.h.b16 %v76
    %v294 = vunpack.c.l.b16 %v77
    %v295 = vunpack.c.h.b16 %v77
    %v296 = vunpack.c.l.b16 %v78
    %v297 = vunpack.c.h.b16 %v78
    %v298 = vunpack.c.l.b16 %v79
    %v299 = vunpack.c.h.b16 %v79
    %v300 = vunpack.c.l.b16 %v80
    %v301 = vunpack.c.h.b16 %v80
    %v302 = vunpack.c.l.b16 %v81
    %v303 = vunpack.c.h.b16 %v81
    %v304 = vunpack.c.l.b16 %v82
    %v305 = vunpack.c.h.b16 %v82
    %v306 = vunpack.c.l.b16 %v83
    %v307 = vunpack.c.h.b16 %v83
    %v308 = vunpack.c.l.b16 %v84
    %v309 = vunpack.c.h.b16 %v84
    %v310 = vunpack.c.l.b16 %v85
    %v311 = vunpack.c.h.b16 %v85
    %v312 = vunpack.c.l.b16 %v86
    %v313 = vunpack.c.h.b16 %v86
    %v314 = vunpack.c.l.b16 %v87
    %v315 = vunpack.c.h.b16 %v87
    %v316 = vunpack.c.l.b16 %v88
    %v317 = vunpack.c.h.b16 %v88
    %v318 = vunpack.c.l.b16 %v89
    %v319 = vunpack.c.h.b16 %v89
    %v320 = vunpack.c.l.b16 %v90
    %v321 = vunpack.c.h.b16 %v90
    %v322 = vunpack.c.l.b16 %v91
    %v323 = vunpack.c.h.b16 %v91
    %v324 = vunpack.c.l.b16 %v92
    %v325 = vunpack.c.h.b16 %v92
    %v326 = vunpack.c.l.b16 %v93
    %v327 = vunpack.c.h.b16 %v93
    %v328 = vunpack.c.l.b16 %v94
    %v329 = vunpack.c.h.b16 %v94
    %v330 = vunpack.c.l.b16 %v95
    %v331 = vunpack.c.h.b16 %v95
    %v332 = vunpack.c.l.b16 %v96
    %v333 = vunpack.c.h.b16 %v96
    %v334 = vunpack.c.l.b16 %v97
    %v335 = vunpack.c.h.b16 %v97
    %v336 = vunpack.c.l.b16 %v98
    %v337 = vunpack.c.h.b16 %v98
    %v338 = vunpack.c.l.b16 %v99
    %v339 = vunpack.c.h.b16 %v99
    %v340 = vunpack.c.l.b16 %v100
    %v341 = vunpack.c.h.b16 %v100
    %v342 = vunpack.c.l.b16 %v101
    %v343 = vunpack.c.h.b16 %v101
    %v344 = vunpack.c.l.b16 %v102
    %v345 = vunpack.c.h.b16 %v102
    %v346 = vunpack.c.l.b16 %v103
    %v347 = vunpack.c.h.b16 %v103
    %v348 = vunpack.c.l.b16 %v104
    %v349 = vunpack.c.h.b16 %v104
    %v350 = vunpack.c.l.b16 %v105
    %v351 = vunpack.c.h.b16 %v105
    %v352 = vunpack.c.l.b16 %v106
    %v353 = vunpack.c.h.b16 %v106
    %v354 = vunpack.c.l.b16 %v107
    %v355 = vunpack.c.h.b16 %v107
    %v356 = vunpack.c.l.b16 %v108
    %v357 = vunpack.c.h.b16 %v108
    %v358 = vunpack.c.l.b16 %v109
    %v359 = vunpack.c.h.b16 %v109
    %v360 = vunpack.c.l.b16 %v110
    %v361 = vunpack.c.h.b16 %v110
    %v362 = vunpack.c.l.b16 %v111
    %v363 = vunpack.c.h.b16 %v111
    %v364 = vunpack.c.l.b16 %v112
    %v365 = vunpack.c.h.b16 %v112
    %v366 = vunpack.c.l.b16 %v113
    %v367 = vunpack.c.h.b16 %v113
    %v368 = vunpack.c.l.b16 %v114
    %v369 = vunpack.c.h.b16 %v114
    %v370 = vunpack.c.l.b16 %v115
    %v371 = vunpack.c.h.b16 %v115
    %v372 = vunpack.c.l.b16 %v116
    %v373 = vunpack.c.h.b16 %v116
    %v374 = vunpack.c.l.b16 %v117
    %v375 = vunpack.c.h.b16 %v117
    %v376 = vunpack.c.l.b16 %v118
    %v377 = vunpack.c.h.b16 %v118
    %v378 = vunpack.c.l.b16 %v119
    %v379 = vunpack.c.h.b16 %v119
    %v380 = vunpack.c.l.b16 %v120
    %v381 = vunpack.c.h.b16 %v120
    %v382 = vunpack.c.l.b16 %v121
    %v383 = vunpack.c.h.b16 %v121
    %v384 = vunpack.c.l.b16 %v122
    %v385 = vunpack.c.h.b16 %v122
    %v386 = vunpack.c.l.b16 %v123
    %v387 = vunpack.c.h.b16 %v123
    %v388 = vunpack.c.l.b16 %v124
    %v389 = vunpack.c.h.b16 %v124
    %v390 = vunpack.c.l.b16 %v125
    %v391 = vunpack.c.h.b16 %v125
    %v392 = vunpack.c.l.b16 %v126
    %v393 = vunpack.c.h.b16 %v126
    %v394 = vunpack.c.l.b16 %v127
    %v395 = vunpack.c.h.b16 %v127
    %v396 = vunpack.c.l.b16 %v128
    %v397 = vunpack.c.h.b16 %v128
    %v398 = vunpack.c.l.b16 %v129
    %v399 = vunpack.c.h.b16 %v129
    %v400 = vunpack.c.l.b16 %v130
    %v401 = vunpack.c.h.b16 %v130
    %v402 = vunpack.c.l.b16 %v131
    %v403 = vunpack.c.h.b16 %v131
    %v404 = vpack.c.b16 %v280, %v276
    %v405 = vpack.c.b16 %v281, %v277
    %v406 = vpack.c.b16 %v282, %v278
    %v407 = vpack.c.b16 %v283, %v279
    %v408 = vpack.c.b16 %v288, %v284
    %v409 = vpack.c.b16 %v289, %v285
    %v410 = vpack.c.b16 %v290, %v286
    %v411 = vpack.c.b16 %v291, %v287
    %v412 = vpack.c.b16 %v296, %v292
    %v413 = vpack.c.b16 %v297, %v293
    %v414 = vpack.c.b16 %v298, %v294
    %v415 = vpack.c.b16 %v299, %v295
    %v416 = vpack.c.b16 %v304, %v300
    %v417 = vpack.c.b16 %v305, %v301
    %v418 = vpack.c.b16 %v306, %v302
    %v419 = vpack.c.b16 %v307, %v303
    %v420 = vpack.c.b16 %v312, %v308
    %v421 = vpack.c.b16 %v313, %v309
    %v422 = vpack.c.b16 %v314, %v310
    %v423 = vpack.c.b16 %v315, %v311
    %v424 = vpack.c.b16 %v320, %v316
    %v425 = vpack.c.b16 %v321, %v317
    %v426 = vpack.c.b16 %v322, %v318
    %v427 = vpack.c.b16 %v323, %v319
    %v428 = vpack.c.b16 %v328, %v324
    %v429 = vpack.c.b16 %v329, %v325
    %v430 = vpack.c.b16 %v330, %v326
    %v431 = vpack.c.b16 %v331, %v327
    %v432 = vpack.c.b16 %v336, %v332
    %v433 = vpack.c.b16 %v337, %v333
    %v434 = vpack.c.b16 %v338, %v334
    %v435 = vpack.c.b16 %v339, %v335
    %v436 = vpack.c.b16 %v344, %v340
    %v437 = vpack.c.b16 %v345, %v341
    %v438 = vpack.c.b16 %v346, %v342
    %v439 = vpack.c.b16 %v347, %v343
    %v440 = vpack.c.b16 %v352, %v348
    %v441 = vpack.c.b16 %v353, %v349
    %v442 = vpack.c.b16 %v354, %v350
    %v443 = vpack.c.b16 %v355, %v351
    %v444 = vpack.c.b16 %v360, %v356
    %v445 = vpack.c.b16 %v361, %v357
    %v446 = vpack.c.b16 %v362, %v358
    %v447 = vpack.c.b16 %v363, %v359
    %v448 = vpack.c.b16 %v368, %v364
    %v449 = vpack.c.b16 %v369, %v365
    %v450 = vpack.c.b16 %v370, %v366
    %v451 = vpack.c.b16 %v371, %v367
    %v452 = vpack.c.b16 %v376, %v372
    %v453 = vpack.c.b16 %v377, %v373
    %v454 = vpack.c.b16 %v378, %v374
    %v455 = vpack.c.b16 %v379, %v375
    %v456 = vpack.c.b16 %v384, %v380
    %v457 = vpack.c.b16 %v385, %v381
    %v458 = vpack.c.b16 %v386, %v382
    %v459 = vpack.c.b16 %v387, %v383
    %v460 = vpack.c.b16 %v392, %v388
    %v461 = vpack.c.b16 %v393, %v389
    %v462 = vpack.c.b16 %v394, %v390
    %v463 = vpack.c.b16 %v395, %v391
    %v464 = vpack.c.b16 %v400, %v396
    %v465 = vpack.c.b16 %v401, %v397
    %v466 = vpack.c.b16 %v402, %v398
    %v467 = vpack.c.b16 %v403, %v399
    %532 = vmatprep.subr.bf16.mxu0 %v433
    %533 = vmatpush1.bf16.msra.mxu0 %v432
    %534 = vmatprep.subr.bf16.mxu0 %v429
    %535 = vmatpush1.bf16.msra.mxu0 %v428
    %536 = vmatprep.subr.bf16.mxu0 %v425
    %537 = vmatpush1.bf16.msra.mxu0 %v424
    %538 = vmatprep.subr.bf16.mxu0 %v421
    %539 = vmatpush1.bf16.msra.mxu0 %v420
    %540 = vmatprep.subr.bf16.mxu0 %v417
    %541 = vmatpush1.bf16.msra.mxu0 %v416
    %542 = vmatprep.subr.bf16.mxu0 %v413
    %543 = vmatpush1.bf16.msra.mxu0 %v412
    %544 = vmatprep.subr.bf16.mxu0 %v409
    %545 = vmatpush1.bf16.msra.mxu0 %v408
    %546 = vmatprep.subr.bf16.mxu0 %v405
    %547 = vmatpush1.bf16.msra.mxu0 %v404
    %548 = vmatprep.subr.bf16.mxu0 %v465
    %549 = vmatpush2.bf16.msra.mxu0 %v464
    %550 = vmatprep.subr.bf16.mxu0 %v461
    %551 = vmatpush2.bf16.msra.mxu0 %v460
    %552 = vmatprep.subr.bf16.mxu0 %v457
    %553 = vmatpush2.bf16.msra.mxu0 %v456
    %554 = vmatprep.subr.bf16.mxu0 %v453
    %555 = vmatpush2.bf16.msra.mxu0 %v452
    %556 = vmatprep.subr.bf16.mxu0 %v449
    %557 = vmatpush2.bf16.msra.mxu0 %v448
    %558 = vmatprep.subr.bf16.mxu0 %v445
    %559 = vmatpush2.bf16.msra.mxu0 %v444
    %560 = vmatprep.subr.bf16.mxu0 %v441
    %561 = vmatpush2.bf16.msra.mxu0 %v440
    %562 = vmatprep.subr.bf16.mxu0 %v437
    %563 = vmatpush2.bf16.msra.mxu0 %v436
    %564 = vmatprep.mubr.bf16.mxu0 %v197
    %565 = vmatmul.mubr.bf16.gmra.mxu0 %v196
    %v566 = vpop.f32.mrf.mxu0
    %v567 = vadd.f32 0.0, %v566
    %v568 = vpop.f32.mrf.mxu0
    %v569 = vadd.f32 0.0, %v568
    %v570 = vpop.f32.mrf.mxu0
    %v571 = vadd.f32 0.0, %v570
    %v572 = vpop.f32.mrf.mxu0
    %v573 = vadd.f32 0.0, %v572
    %574 = vmatprep.mubr.bf16.mxu0 %v199
    %575 = vmatmul.mubr.bf16.gmra.mxu0 %v198
    %v576 = vpop.f32.mrf.mxu0
    %v577 = vadd.f32 0.0, %v576
    %v578 = vpop.f32.mrf.mxu0
    %v579 = vadd.f32 0.0, %v578
    %v580 = vpop.f32.mrf.mxu0
    %v581 = vadd.f32 0.0, %v580
    %v582 = vpop.f32.mrf.mxu0
    %v583 = vadd.f32 0.0, %v582
    %584 = vmatprep.mubr.bf16.mxu0 %v201
    %585 = vmatmul.mubr.bf16.gmra.mxu0 %v200
    %v586 = vpop.f32.mrf.mxu0
    %v587 = vadd.f32 0.0, %v586
    %v588 = vpop.f32.mrf.mxu0
    %v589 = vadd.f32 0.0, %v588
    %v590 = vpop.f32.mrf.mxu0
    %v591 = vadd.f32 0.0, %v590
    %v592 = vpop.f32.mrf.mxu0
    %v593 = vadd.f32 0.0, %v592
    %594 = vmatprep.mubr.bf16.mxu0 %v203
    %595 = vmatmul.mubr.bf16.gmra.mxu0 %v202
    %v596 = vpop.f32.mrf.mxu0
    %v597 = vadd.f32 0.0, %v596
    %v598 = vpop.f32.mrf.mxu0
    %v599 = vadd.f32 0.0, %v598
    %v600 = vpop.f32.mrf.mxu0
    %v601 = vadd.f32 0.0, %v600
    %v602 = vpop.f32.mrf.mxu0
    %v603 = vadd.f32 0.0, %v602
    %604 = vdwg.mxu0
    %605 = vmatprep.subr.bf16.mxu0 %v435
    %606 = vmatpush1.bf16.msra.mxu0 %v434
    %607 = vmatprep.subr.bf16.mxu0 %v431
    %608 = vmatpush1.bf16.msra.mxu0 %v430
    %609 = vmatprep.subr.bf16.mxu0 %v427
    %610 = vmatpush1.bf16.msra.mxu0 %v426
    %611 = vmatprep.subr.bf16.mxu0 %v423
    %612 = vmatpush1.bf16.msra.mxu0 %v422
    %613 = vmatprep.subr.bf16.mxu0 %v419
    %614 = vmatpush1.bf16.msra.mxu0 %v418
    %615 = vmatprep.subr.bf16.mxu0 %v415
    %616 = vmatpush1.bf16.msra.mxu0 %v414
    %617 = vmatprep.subr.bf16.mxu0 %v411
    %618 = vmatpush1.bf16.msra.mxu0 %v410
    %619 = vmatprep.subr.bf16.mxu0 %v407
    %620 = vmatpush1.bf16.msra.mxu0 %v406
    %621 = vmatprep.subr.bf16.mxu0 %v467
    %622 = vmatpush2.bf16.msra.mxu0 %v466
    %623 = vmatprep.subr.bf16.mxu0 %v463
    %624 = vmatpush2.bf16.msra.mxu0 %v462
    %625 = vmatprep.subr.bf16.mxu0 %v459
    %626 = vmatpush2.bf16.msra.mxu0 %v458
    %627 = vmatprep.subr.bf16.mxu0 %v455
    %628 = vmatpush2.bf16.msra.mxu0 %v454
    %629 = vmatprep.subr.bf16.mxu0 %v451
    %630 = vmatpush2.bf16.msra.mxu0 %v450
    %631 = vmatprep.subr.bf16.mxu0 %v447
    %632 = vmatpush2.bf16.msra.mxu0 %v446
    %633 = vmatprep.subr.bf16.mxu0 %v443
    %634 = vmatpush2.bf16.msra.mxu0 %v442
    %635 = vmatprep.subr.bf16.mxu0 %v439
    %636 = vmatpush2.bf16.msra.mxu0 %v438
    %637 = vmatprep.mubr.bf16.mxu0 %v197
    %638 = vmatmul.mubr.bf16.gmra.mxu0 %v196
    %v639 = vpop.f32.mrf.mxu0
    %v640 = vadd.f32 0.0, %v639
    %v641 = vpop.f32.mrf.mxu0
    %v642 = vadd.f32 0.0, %v641
    %v643 = vpop.f32.mrf.mxu0
    %v644 = vadd.f32 0.0, %v643
    %v645 = vpop.f32.mrf.mxu0
    %v646 = vadd.f32 0.0, %v645
    %647 = vmatprep.mubr.bf16.mxu0 %v199
    %648 = vmatmul.mubr.bf16.gmra.mxu0 %v198
    %v649 = vpop.f32.mrf.mxu0
    %v650 = vadd.f32 0.0, %v649
    %v651 = vpop.f32.mrf.mxu0
    %v652 = vadd.f32 0.0, %v651
    %v653 = vpop.f32.mrf.mxu0
    %v654 = vadd.f32 0.0, %v653
    %v655 = vpop.f32.mrf.mxu0
    %v656 = vadd.f32 0.0, %v655
    %657 = vmatprep.mubr.bf16.mxu0 %v201
    %658 = vmatmul.mubr.bf16.gmra.mxu0 %v200
    %v659 = vpop.f32.mrf.mxu0
    %v660 = vadd.f32 0.0, %v659
    %v661 = vpop.f32.mrf.mxu0
    %v662 = vadd.f32 0.0, %v661
    %v663 = vpop.f32.mrf.mxu0
    %v664 = vadd.f32 0.0, %v663
    %v665 = vpop.f32.mrf.mxu0
    %v666 = vadd.f32 0.0, %v665
    %667 = vmatprep.mubr.bf16.mxu0 %v203
    %668 = vmatmul.mubr.bf16.gmra.mxu0 %v202
    %v669 = vpop.f32.mrf.mxu0
    %v670 = vadd.f32 0.0, %v669
    %v671 = vpop.f32.mrf.mxu0
    %v672 = vadd.f32 0.0, %v671
    %v673 = vpop.f32.mrf.mxu0
    %v674 = vadd.f32 0.0, %v673
    %v675 = vpop.f32.mrf.mxu0
    %v676 = vadd.f32 0.0, %v675
    %677 = vdwg.mxu0
    %v678 = vadd.f32 %v132, %v567
    %v679 = vadd.f32 %v133, %v569
    %v680 = vadd.f32 %v134, %v640
    %v681 = vadd.f32 %v135, %v642
    %v682 = vadd.f32 %v136, %v571
    %v683 = vadd.f32 %v137, %v573
    %v684 = vadd.f32 %v138, %v644
    %v685 = vadd.f32 %v139, %v646
    %v686 = vadd.f32 %v140, %v577
    %v687 = vadd.f32 %v141, %v579
    %v688 = vadd.f32 %v142, %v650
    %v689 = vadd.f32 %v143, %v652
    %v690 = vadd.f32 %v144, %v581
    %v691 = vadd.f32 %v145, %v583
    %v692 = vadd.f32 %v146, %v654
    %v693 = vadd.f32 %v147, %v656
    %v694 = vadd.f32 %v148, %v587
    %v695 = vadd.f32 %v149, %v589
    %v696 = vadd.f32 %v150, %v660
    %v697 = vadd.f32 %v151, %v662
    %v698 = vadd.f32 %v152, %v591
    %v699 = vadd.f32 %v153, %v593
    %v700 = vadd.f32 %v154, %v664
    %v701 = vadd.f32 %v155, %v666
    %v702 = vadd.f32 %v156, %v597
    %v703 = vadd.f32 %v157, %v599
    %v704 = vadd.f32 %v158, %v670
    %v705 = vadd.f32 %v159, %v672
    %v706 = vadd.f32 %v160, %v601
    %v707 = vadd.f32 %v161, %v603
    %v708 = vadd.f32 %v162, %v674
    %v709 = vadd.f32 %v163, %v676
    %710 = vst [vmem:[#allocation2] sm:$0xff] %v678
    %711 = vst [vmem:[#allocation2 + $0x8] sm:$0xff] %v679
    %712 = vst [vmem:[#allocation2 + $0x10] sm:$0xff] %v680
    %713 = vst [vmem:[#allocation2 + $0x18] sm:$0xff] %v681
    %714 = vst [vmem:[#allocation2 + $0x20] sm:$0xff] %v682
    %715 = vst [vmem:[#allocation2 + $0x28] sm:$0xff] %v683
    %716 = vst [vmem:[#allocation2 + $0x30] sm:$0xff] %v684
    %717 = vst [vmem:[#allocation2 + $0x38] sm:$0xff] %v685
    %718 = vst [vmem:[#allocation2 + $0x40] sm:$0xff] %v686
    %719 = vst [vmem:[#allocation2 + $0x48] sm:$0xff] %v687
    %720 = vst [vmem:[#allocation2 + $0x50] sm:$0xff] %v688
    %721 = vst [vmem:[#allocation2 + $0x58] sm:$0xff] %v689
    %722 = vst [vmem:[#allocation2 + $0x60] sm:$0xff] %v690
    %723 = vst [vmem:[#allocation2 + $0x68] sm:$0xff] %v691
    %724 = vst [vmem:[#allocation2 + $0x70] sm:$0xff] %v692
    %725 = vst [vmem:[#allocation2 + $0x78] sm:$0xff] %v693
    %726 = vst [vmem:[#allocation2 + $0x80] sm:$0xff] %v694
    %727 = vst [vmem:[#allocation2 + $0x88] sm:$0xff] %v695
    %728 = vst [vmem:[#allocation2 + $0x90] sm:$0xff] %v696
    %729 = vst [vmem:[#allocation2 + $0x98] sm:$0xff] %v697
    %730 = vst [vmem:[#allocation2 + $0xa0] sm:$0xff] %v698
    %731 = vst [vmem:[#allocation2 + $0xa8] sm:$0xff] %v699
    %732 = vst [vmem:[#allocation2 + $0xb0] sm:$0xff] %v700
    %733 = vst [vmem:[#allocation2 + $0xb8] sm:$0xff] %v701
    %734 = vst [vmem:[#allocation2 + $0xc0] sm:$0xff] %v702
    %735 = vst [vmem:[#allocation2 + $0xc8] sm:$0xff] %v703
    %736 = vst [vmem:[#allocation2 + $0xd0] sm:$0xff] %v704
    %737 = vst [vmem:[#allocation2 + $0xd8] sm:$0xff] %v705
    %738 = vst [vmem:[#allocation2 + $0xe0] sm:$0xff] %v706
    %739 = vst [vmem:[#allocation2 + $0xe8] sm:$0xff] %v707
    %740 = vst [vmem:[#allocation2 + $0xf0] sm:$0xff] %v708
    %741 = vst [vmem:[#allocation2 + $0xf8] sm:$0xff] %v709
    // Predicated region
    $region26: #{tpu_custom_call.1} parent=1 // pred_check
      %p742 = pneg %p32
    $region27: #{tpu_custom_call.1} parent=1 // pred_check_branch
      %744 = sbr.rel (%p742) target = $region29
    $region28: #{tpu_custom_call.1} parent=1 // pred_region
      %v745 = vld [vmem:[#allocation2] sm:$0xff]
      %v746 = vld [vmem:[#allocation2 + $0x8] sm:$0xff]
      %v747 = vld [vmem:[#allocation2 + $0x10] sm:$0xff]
      %v748 = vld [vmem:[#allocation2 + $0x18] sm:$0xff]
      %v749 = vld [vmem:[#allocation2 + $0x20] sm:$0xff]
      %v750 = vld [vmem:[#allocation2 + $0x28] sm:$0xff]
      %v751 = vld [vmem:[#allocation2 + $0x30] sm:$0xff]
      %v752 = vld [vmem:[#allocation2 + $0x38] sm:$0xff]
      %v753 = vld [vmem:[#allocation2 + $0x40] sm:$0xff]
      %v754 = vld [vmem:[#allocation2 + $0x48] sm:$0xff]
      %v755 = vld [vmem:[#allocation2 + $0x50] sm:$0xff]
      %v756 = vld [vmem:[#allocation2 + $0x58] sm:$0xff]
      %v757 = vld [vmem:[#allocation2 + $0x60] sm:$0xff]
      %v758 = vld [vmem:[#allocation2 + $0x68] sm:$0xff]
      %v759 = vld [vmem:[#allocation2 + $0x70] sm:$0xff]
      %v760 = vld [vmem:[#allocation2 + $0x78] sm:$0xff]
      %v761 = vld [vmem:[#allocation2 + $0x80] sm:$0xff]
      %v762 = vld [vmem:[#allocation2 + $0x88] sm:$0xff]
      %v763 = vld [vmem:[#allocation2 + $0x90] sm:$0xff]
      %v764 = vld [vmem:[#allocation2 + $0x98] sm:$0xff]
      %v765 = vld [vmem:[#allocation2 + $0xa0] sm:$0xff]
      %v766 = vld [vmem:[#allocation2 + $0xa8] sm:$0xff]
      %v767 = vld [vmem:[#allocation2 + $0xb0] sm:$0xff]
      %v768 = vld [vmem:[#allocation2 + $0xb8] sm:$0xff]
      %v769 = vld [vmem:[#allocation2 + $0xc0] sm:$0xff]
      %v770 = vld [vmem:[#allocation2 + $0xc8] sm:$0xff]
      %v771 = vld [vmem:[#allocation2 + $0xd0] sm:$0xff]
      %v772 = vld [vmem:[#allocation2 + $0xd8] sm:$0xff]
      %v773 = vld [vmem:[#allocation2 + $0xe0] sm:$0xff]
      %v774 = vld [vmem:[#allocation2 + $0xe8] sm:$0xff]
      %v775 = vld [vmem:[#allocation2 + $0xf0] sm:$0xff]
      %v776 = vld [vmem:[#allocation2 + $0xf8] sm:$0xff]
      %v777 = vld [vmem:[%s2] sm:$0xff]
      %v778 = vld [vmem:[%s2 + $0x8] sm:$0xff]
      %v779 = vld [vmem:[%s2 + $0x10] sm:$0xff]
      %v780 = vld [vmem:[%s2 + $0x18] sm:$0xff]
      %v781 = vld [vmem:[%s2 + $0x20] sm:$0xff]
      %v782 = vld [vmem:[%s2 + $0x28] sm:$0xff]
      %v783 = vld [vmem:[%s2 + $0x30] sm:$0xff]
      %v784 = vld [vmem:[%s2 + $0x38] sm:$0xff]
      %786 = vset.pattern.permute.xlu0 0
      %787 = vperm.xlu0 %786, %v777
      %v788 = vpop.permute.xlu0 %787
      %791 = vset.pattern.permute.xlu0 0
      %792 = vperm.xlu0 %791, %v778
      %v793 = vpop.permute.xlu0 %792
      %796 = vset.pattern.permute.xlu0 0
      %797 = vperm.xlu0 %796, %v779
      %v798 = vpop.permute.xlu0 %797
      %801 = vset.pattern.permute.xlu0 0
      %802 = vperm.xlu0 %801, %v780
      %v803 = vpop.permute.xlu0 %802
      %806 = vset.pattern.permute.xlu0 0
      %807 = vperm.xlu0 %806, %v781
      %v808 = vpop.permute.xlu0 %807
      %811 = vset.pattern.permute.xlu0 0
      %812 = vperm.xlu0 %811, %v782
      %v813 = vpop.permute.xlu0 %812
      %816 = vset.pattern.permute.xlu0 0
      %817 = vperm.xlu0 %816, %v783
      %v818 = vpop.permute.xlu0 %817
      %821 = vset.pattern.permute.xlu0 0
      %822 = vperm.xlu0 %821, %v784
      %v823 = vpop.permute.xlu0 %822
      %v825 = vmul.f32 %v745, %v788
      %v826 = vmul.f32 %v746, %v788
      %v827 = vmul.f32 %v747, %v788
      %v828 = vmul.f32 %v748, %v788
      %v829 = vmul.f32 %v749, %v793
      %v830 = vmul.f32 %v750, %v793
      %v831 = vmul.f32 %v751, %v793
      %v832 = vmul.f32 %v752, %v793
      %v833 = vmul.f32 %v753, %v798
      %v834 = vmul.f32 %v754, %v798
      %v835 = vmul.f32 %v755, %v798
      %v836 = vmul.f32 %v756, %v798
      %v837 = vmul.f32 %v757, %v803
      %v838 = vmul.f32 %v758, %v803
      %v839 = vmul.f32 %v759, %v803
      %v840 = vmul.f32 %v760, %v803
      %v841 = vmul.f32 %v761, %v808
      %v842 = vmul.f32 %v762, %v808
      %v843 = vmul.f32 %v763, %v808
      %v844 = vmul.f32 %v764, %v808
      %v845 = vmul.f32 %v765, %v813
      %v846 = vmul.f32 %v766, %v813
      %v847 = vmul.f32 %v767, %v813
      %v848 = vmul.f32 %v768, %v813
      %v849 = vmul.f32 %v769, %v818
      %v850 = vmul.f32 %v770, %v818
      %v851 = vmul.f32 %v771, %v818
      %v852 = vmul.f32 %v772, %v818
      %v853 = vmul.f32 %v773, %v823
      %v854 = vmul.f32 %v774, %v823
      %v855 = vmul.f32 %v775, %v823
      %v856 = vmul.f32 %v776, %v823
      %v857 = vld [vmem:[%s3] sm:$0xff]
      %v858 = vld [vmem:[%s3 + $0x8] sm:$0xff]
      %v859 = vld [vmem:[%s3 + $0x10] sm:$0xff]
      %v860 = vld [vmem:[%s3 + $0x18] sm:$0xff]
      %v861 = vld [vmem:[%s3 + $0x20] sm:$0xff]
      %v862 = vld [vmem:[%s3 + $0x28] sm:$0xff]
      %v863 = vld [vmem:[%s3 + $0x30] sm:$0xff]
      %v864 = vld [vmem:[%s3 + $0x38] sm:$0xff]
      %866 = vset.pattern.permute.xlu0 0
      %867 = vperm.xlu0 %866, %v857
      %v868 = vpop.permute.xlu0 %867
      %871 = vset.pattern.permute.xlu0 0
      %872 = vperm.xlu0 %871, %v858
      %v873 = vpop.permute.xlu0 %872
      %876 = vset.pattern.permute.xlu0 0
      %877 = vperm.xlu0 %876, %v859
      %v878 = vpop.permute.xlu0 %877
      %881 = vset.pattern.permute.xlu0 0
      %882 = vperm.xlu0 %881, %v860
      %v883 = vpop.permute.xlu0 %882
      %886 = vset.pattern.permute.xlu0 0
      %887 = vperm.xlu0 %886, %v861
      %v888 = vpop.permute.xlu0 %887
      %891 = vset.pattern.permute.xlu0 0
      %892 = vperm.xlu0 %891, %v862
      %v893 = vpop.permute.xlu0 %892
      %896 = vset.pattern.permute.xlu0 0
      %897 = vperm.xlu0 %896, %v863
      %v898 = vpop.permute.xlu0 %897
      %901 = vset.pattern.permute.xlu0 0
      %902 = vperm.xlu0 %901, %v864
      %v903 = vpop.permute.xlu0 %902
      %v905 = vadd.f32 %v825, %v868
      %v906 = vadd.f32 %v826, %v868
      %v907 = vadd.f32 %v827, %v868
      %v908 = vadd.f32 %v828, %v868
      %v909 = vadd.f32 %v829, %v873
      %v910 = vadd.f32 %v830, %v873
      %v911 = vadd.f32 %v831, %v873
      %v912 = vadd.f32 %v832, %v873
      %v913 = vadd.f32 %v833, %v878
      %v914 = vadd.f32 %v834, %v878
      %v915 = vadd.f32 %v835, %v878
      %v916 = vadd.f32 %v836, %v878
      %v917 = vadd.f32 %v837, %v883
      %v918 = vadd.f32 %v838, %v883
      %v919 = vadd.f32 %v839, %v883
      %v920 = vadd.f32 %v840, %v883
      %v921 = vadd.f32 %v841, %v888
      %v922 = vadd.f32 %v842, %v888
      %v923 = vadd.f32 %v843, %v888
      %v924 = vadd.f32 %v844, %v888
      %v925 = vadd.f32 %v845, %v893
      %v926 = vadd.f32 %v846, %v893
      %v927 = vadd.f32 %v847, %v893
      %v928 = vadd.f32 %v848, %v893
      %v929 = vadd.f32 %v849, %v898
      %v930 = vadd.f32 %v850, %v898
      %v931 = vadd.f32 %v851, %v898
      %v932 = vadd.f32 %v852, %v898
      %v933 = vadd.f32 %v853, %v903
      %v934 = vadd.f32 %v854, %v903
      %v935 = vadd.f32 %v855, %v903
      %v936 = vadd.f32 %v856, %v903
      %v937 = vmax.f32 %v905, 0.0
      %v938 = vmax.f32 %v906, 0.0
      %v939 = vmax.f32 %v907, 0.0
      %v940 = vmax.f32 %v908, 0.0
      %v941 = vmax.f32 %v909, 0.0
      %v942 = vmax.f32 %v910, 0.0
      %v943 = vmax.f32 %v911, 0.0
      %v944 = vmax.f32 %v912, 0.0
      %v945 = vmax.f32 %v913, 0.0
      %v946 = vmax.f32 %v914, 0.0
      %v947 = vmax.f32 %v915, 0.0
      %v948 = vmax.f32 %v916, 0.0
      %v949 = vmax.f32 %v917, 0.0
      %v950 = vmax.f32 %v918, 0.0
      %v951 = vmax.f32 %v919, 0.0
      %v952 = vmax.f32 %v920, 0.0
      %v953 = vmax.f32 %v921, 0.0
      %v954 = vmax.f32 %v922, 0.0
      %v955 = vmax.f32 %v923, 0.0
      %v956 = vmax.f32 %v924, 0.0
      %v957 = vmax.f32 %v925, 0.0
      %v958 = vmax.f32 %v926, 0.0
      %v959 = vmax.f32 %v927, 0.0
      %v960 = vmax.f32 %v928, 0.0
      %v961 = vmax.f32 %v929, 0.0
      %v962 = vmax.f32 %v930, 0.0
      %v963 = vmax.f32 %v931, 0.0
      %v964 = vmax.f32 %v932, 0.0
      %v965 = vmax.f32 %v933, 0.0
      %v966 = vmax.f32 %v934, 0.0
      %v967 = vmax.f32 %v935, 0.0
      %v968 = vmax.f32 %v936, 0.0
      %v969 = vpack.c.bf16 %v941, %v937
      %v970 = vpack.c.bf16 %v942, %v938
      %v971 = vpack.c.bf16 %v943, %v939
      %v972 = vpack.c.bf16 %v944, %v940
      %v973 = vpack.c.bf16 %v949, %v945
      %v974 = vpack.c.bf16 %v950, %v946
      %v975 = vpack.c.bf16 %v951, %v947
      %v976 = vpack.c.bf16 %v952, %v948
      %v977 = vpack.c.bf16 %v957, %v953
      %v978 = vpack.c.bf16 %v958, %v954
      %v979 = vpack.c.bf16 %v959, %v955
      %v980 = vpack.c.bf16 %v960, %v956
      %v981 = vpack.c.bf16 %v965, %v961
      %v982 = vpack.c.bf16 %v966, %v962
      %v983 = vpack.c.bf16 %v967, %v963
      %v984 = vpack.c.bf16 %v968, %v964
      %v1001 = vunpack.c.l.b16 %v969
      %v1002 = vunpack.c.l.b16 %v970
      %v1003 = vunpack.c.l.b16 %v971
      %v1004 = vunpack.c.l.b16 %v972
      %v1005 = vunpack.c.h.b16 %v969
      %v1006 = vunpack.c.h.b16 %v970
      %v1007 = vunpack.c.h.b16 %v971
      %v1008 = vunpack.c.h.b16 %v972
      %v1009 = vunpack.c.l.b16 %v973
      %v1010 = vunpack.c.l.b16 %v974
      %v1011 = vunpack.c.l.b16 %v975
      %v1012 = vunpack.c.l.b16 %v976
      %v1013 = vunpack.c.h.b16 %v973
      %v1014 = vunpack.c.h.b16 %v974
      %v1015 = vunpack.c.h.b16 %v975
      %v1016 = vunpack.c.h.b16 %v976
      %v1017 = vunpack.c.l.b16 %v977
      %v1018 = vunpack.c.l.b16 %v978
      %v1019 = vunpack.c.l.b16 %v979
      %v1020 = vunpack.c.l.b16 %v980
      %v1021 = vunpack.c.h.b16 %v977
      %v1022 = vunpack.c.h.b16 %v978
      %v1023 = vunpack.c.h.b16 %v979
      %v1024 = vunpack.c.h.b16 %v980
      %v1025 = vunpack.c.l.b16 %v981
      %v1026 = vunpack.c.l.b16 %v982
      %v1027 = vunpack.c.l.b16 %v983
      %v1028 = vunpack.c.l.b16 %v984
      %v1029 = vunpack.c.h.b16 %v981
      %v1030 = vunpack.c.h.b16 %v982
      %v1031 = vunpack.c.h.b16 %v983
      %v1032 = vunpack.c.h.b16 %v984
      %v1033 = vpack.c.b16 %v1002, %v1001
      %v1034 = vpack.c.b16 %v1004, %v1003
      %v1035 = vpack.c.b16 %v1006, %v1005
      %v1036 = vpack.c.b16 %v1008, %v1007
      %v1037 = vpack.c.b16 %v1010, %v1009
      %v1038 = vpack.c.b16 %v1012, %v1011
      %v1039 = vpack.c.b16 %v1014, %v1013
      %v1040 = vpack.c.b16 %v1016, %v1015
      %v1041 = vpack.c.b16 %v1018, %v1017
      %v1042 = vpack.c.b16 %v1020, %v1019
      %v1043 = vpack.c.b16 %v1022, %v1021
      %v1044 = vpack.c.b16 %v1024, %v1023
      %v1045 = vpack.c.b16 %v1026, %v1025
      %v1046 = vpack.c.b16 %v1028, %v1027
      %v1047 = vpack.c.b16 %v1030, %v1029
      %v1048 = vpack.c.b16 %v1032, %v1031
      %1065 = vst [vmem:[#allocation6] sm:$0xff] %v1033
      %1066 = vst [vmem:[#allocation6 + $0x8] sm:$0xff] %v1034
      %1067 = vst [vmem:[#allocation6 + $0x10] sm:$0xff] %v1035
      %1068 = vst [vmem:[#allocation6 + $0x18] sm:$0xff] %v1036
      %1069 = vst [vmem:[#allocation6 + $0x20] sm:$0xff] %v1037
      %1070 = vst [vmem:[#allocation6 + $0x28] sm:$0xff] %v1038
      %1071 = vst [vmem:[#allocation6 + $0x30] sm:$0xff] %v1039
      %1072 = vst [vmem:[#allocation6 + $0x38] sm:$0xff] %v1040
      %1073 = vst [vmem:[#allocation6 + $0x40] sm:$0xff] %v1041
      %1074 = vst [vmem:[#allocation6 + $0x48] sm:$0xff] %v1042
      %1075 = vst [vmem:[#allocation6 + $0x50] sm:$0xff] %v1043
      %1076 = vst [vmem:[#allocation6 + $0x58] sm:$0xff] %v1044
      %1077 = vst [vmem:[#allocation6 + $0x60] sm:$0xff] %v1045
      %1078 = vst [vmem:[#allocation6 + $0x68] sm:$0xff] %v1046
      %1079 = vst [vmem:[#allocation6 + $0x70] sm:$0xff] %v1047
      %1080 = vst [vmem:[#allocation6 + $0x78] sm:$0xff] %v1048
    $region29: #{tpu_custom_call.1} parent=1 // pred_fallthru
      _
    // Predicated region
    $region30: #{tpu_custom_call.1} parent=1 // pred_check
      _
    $region31: #{tpu_custom_call.1} parent=1 // pred_check_branch
      %1082 = sbr.rel (0) target = $region33
    $region32: #{tpu_custom_call.1} parent=1 // pred_region
      %s1084 = ssub.s32 2048, 2048
      %1085 = vsyncadd [#allocation5], %s1084
      %s1086 = sshll.u32 [#allocation6], 4
      %s1087 = int_to_ptr.vmem [resolvable:$true] %s1086
      %1092 = dma.vmem_to_hbm [thread:$0]  %s1087, 2048, %s4, [#allocation5], 256, 256, 16
    $region33: #{tpu_custom_call.1} parent=1 // pred_fallthru
      _
    // Predicated region
    $region34: #{tpu_custom_call.1} parent=1 // pred_check
      _
    $region35: #{tpu_custom_call.1} parent=1 // pred_check_branch
      %1094 = sbr.rel (0) target = $region37
    $region36: #{tpu_custom_call.1} parent=1 // pred_region
      %1095 = dma.done [#allocation5], 2048
    $region37: #{tpu_custom_call.1} parent=1 // pred_fallthru
      _
    %1096 = vsyncpa [#allocation4], 1
    %1097 = vsyncpa [#allocation5], 1

</llo_original>
